<compile_context>
chip_gen: v5e
topology: v5e:2x2
jax: 0.10.0
libtpu: 0.0.40
codegen_flags: <defaults>
</compile_context>

<pallas_src>
import math
from functools import partial

import jax
import jax.numpy as jnp
from jax.experimental import pallas as pl
from jax.experimental.pallas import tpu as pltpu

# ---- config (mirrors config.IMAGE_SIZE / D_MODEL / N_HEAD / FF_DIM / ENCODER.NUM_LAYER) ----
IMAGE_SIZE = 64
PATCH = 16
D_MODEL = 32
N_HEAD = 4
FF_DIM = 64
ENCODER_NUM_LAYER = 2
LN_EPS = 1e-5

_ENC_PARAM_ORDER = ["wqkv", "bqkv", "wo", "bo",
                    "ln1_g", "ln1_b", "ln2_g", "ln2_b",
                    "w1", "b1", "w2", "b2"]


# ============================ patch / conv embedding ============================
def patch_embed_kernel(p_ref, w_ref, b_ref, o_ref):
    # (B*seq, 768) @ (768, D) + (1, D)   -- Conv2d(k=16, s=16) == per-patch linear.
    o_ref[...] = (jnp.dot(p_ref[...], w_ref[...], preferred_element_type=jnp.float32)
                  + b_ref[...]).astype(o_ref.dtype)


def _extract_patches(inputs):
    """(B, 3, H, W) -> (B*nh*nw, 3*16*16), flattened in (c, kh, kw) order (== torch.flatten /
    conv-weight order). Layout plumbing only; the matmul happens in the Pallas kernel."""
    B, C, H, W = inputs.shape
    nh, nw = H // PATCH, W // PATCH
    x = inputs.reshape(B, C, nh, PATCH, nw, PATCH)
    x = jnp.transpose(x, (0, 2, 4, 1, 3, 5))          # (B, nh, nw, C, 16, 16)
    return x.reshape(B * nh * nw, C * PATCH * PATCH)


def _patch_linear(patches, w_t, b_row, out_rows, d_model):
    return pl.pallas_call(
        patch_embed_kernel,
        out_shape=jax.ShapeDtypeStruct((out_rows, d_model), jnp.float32),
    )(patches, w_t, b_row)


def image_embedder_forward(params, inputs, mode="conv"):
    """Mirrors ImageEmbedder.forward as provided (returns the (B, seq, D) embedding)."""
    B, C, H, W = inputs.shape
    nh, nw = H // PATCH, W // PATCH
    patches = _extract_patches(inputs)                              # (B*seq, 768)

    if mode == "conv":
        d_model = params["conv_w"].shape[0]
        w_t = params["conv_w"].reshape(d_model, C * PATCH * PATCH).T   # (768, D)
        b_row = params["conv_b"].reshape(1, d_model)
    elif mode == "linear":
        # TODO(synk): reference 'linear' mode allocates a (B, seq_L, ...) buffer but writes
        # seq_L**2 patches (a PyTorch-side bug); implemented here with the correct patch count.
        d_model = params["lin_w"].shape[0]
        w_t = params["lin_w"].T                                        # (768, D)
        b_row = params["lin_b"].reshape(1, d_model)
    else:
        raise ValueError(f"{mode} mode Embedding is not available!!")

    out = _patch_linear(patches, w_t, b_row, B * nh * nw, d_model)
    return out.reshape(B, nh * nw, d_model)                          # == permute(0,2,3,1).view(B,-1,D)


# ============================ TransformerEncoder ============================
def _layer_norm(x, g, b):
    mu = jnp.mean(x, axis=-1, keepdims=True)
    var = jnp.mean((x - mu) ** 2, axis=-1, keepdims=True)
    return (x - mu) * jax.lax.rsqrt(var + LN_EPS) * g + b


def _self_attention(x, wqkv, bqkv, wo, bo, n_head):
    """nn.MultiheadAttention (self-attention, no mask): fused QKV projection, head-batched
    contractions, single softmax pass, one out_proj matmul."""
    T, D = x.shape
    dh = D // n_head
    qkv = jnp.dot(x, wqkv, preferred_element_type=jnp.float32) + bqkv      # (T, 3D)
    q, k, v = qkv[:, :D], qkv[:, D:2 * D], qkv[:, 2 * D:]
    q3 = jnp.stack([q[:, h * dh:(h + 1) * dh] for h in range(n_head)], axis=0)   # (H, T, dh)
    k3 = jnp.stack([k[:, h * dh:(h + 1) * dh] for h in range(n_head)], axis=0)
    v3 = jnp.stack([v[:, h * dh:(h + 1) * dh] for h in range(n_head)], axis=0)
    s = jnp.einsum("hqd,hkd->hqk", q3, k3, preferred_element_type=jnp.float32)
    s = s * (1.0 / math.sqrt(dh))
    s = s - jnp.max(s, axis=-1, keepdims=True)
    p = jnp.exp(s)
    p = p * pl.reciprocal(jnp.sum(p, axis=-1, keepdims=True), approx=True)       # EUP divide
    a3 = jnp.einsum("hqk,hkd->hqd", p, v3, preferred_element_type=jnp.float32)   # (H, T, dh)
    a = jnp.concatenate([a3[h] for h in range(n_head)], axis=-1)                 # (T, D)
    return jnp.dot(a, wo, preferred_element_type=jnp.float32) + bo


def encoder_stack_kernel(x_ref,
                         wqkv_ref, bqkv_ref, wo_ref, bo_ref,
                         ln1g_ref, ln1b_ref, ln2g_ref, ln2b_ref,
                         w1_ref, b1_ref, w2_ref, b2_ref,
                         o_ref, *, n_head, num_layers):
    """All encoder layers fused: the (T, D) activation stays in vregs/VMEM across layers."""
    x = x_ref[0].astype(jnp.float32)                   # (T, D) for this batch element
    for l in range(num_layers):                        # static unroll over the layer stack
        attn = _self_attention(x, wqkv_ref[l], bqkv_ref[l], wo_ref[l], bo_ref[l], n_head)
        x = _layer_norm(x + attn, ln1g_ref[l], ln1b_ref[l])
        h = jnp.maximum(jnp.dot(x, w1_ref[l], preferred_element_type=jnp.float32) + b1_ref[l], 0.0)
        ff = jnp.dot(h, w2_ref[l], preferred_element_type=jnp.float32) + b2_ref[l]
        x = _layer_norm(x + ff, ln2g_ref[l], ln2b_ref[l])
    o_ref[0] = x.astype(o_ref.dtype)


def _replicated_spec(a):
    return pl.BlockSpec(a.shape, lambda b: (0,) * a.ndim)


def transformer_encoder_forward(enc_params, x, n_head=N_HEAD):
    """TransformerEncoder.forward: stack of nn.TransformerEncoderLayer (post-norm, ReLU).
    x is consumed batch-major (B, T, D) directly (no wrapper transposes); axis 1 is the
    sequence, i.e. this equals nn.TransformerEncoder applied to the (T, B, D) permutation."""
    B, T, D = x.shape
    args = [enc_params[k] for k in _ENC_PARAM_ORDER]
    num_layers = args[0].shape[0]
    return pl.pallas_call(
        partial(encoder_stack_kernel, n_head=n_head, num_layers=num_layers),
        out_shape=jax.ShapeDtypeStruct((B, T, D), jnp.float32),
        grid=(B,),
        in_specs=[pl.BlockSpec((1, T, D), lambda b: (b, 0, 0))]
                 + [_replicated_spec(a) for a in args],
        out_specs=pl.BlockSpec((1, T, D), lambda b: (b, 0, 0)),
        compiler_params=pltpu.CompilerParams(dimension_semantics=("parallel",)),
    )(x, *args)


# ============================ parameter construction ============================
def init_encoder_params(keys, d_model, ff_dim):
    layers = []
    for k in keys:
        kk = jax.random.split(k, 6)
        s_d = 1.0 / math.sqrt(d_model)
        s_f = 1.0 / math.sqrt(ff_dim)
        u = lambda kq, shape, s: jax.random.uniform(kq, shape, jnp.float32, -s, s)
        layers.append({
            "in_w": u(kk[0], (3 * d_model, d_model), s_d),   # MultiheadAttention in_proj_weight
            "in_b": u(kk[1], (3 * d_model,), s_d),
            "out_w": u(kk[2], (d_model, d_model), s_d),      # out_proj
            "out_b": jnp.zeros((d_model,), jnp.float32),
            "ln1_g": jnp.ones((d_model,), jnp.float32),
            "ln1_b": jnp.zeros((d_model,), jnp.float32),
            "ln2_g": jnp.ones((d_model,), jnp.float32),
            "ln2_b": jnp.zeros((d_model,), jnp.float32),
            "l1_w": u(kk[3], (ff_dim, d_model), s_d),        # linear1
            "l1_b": u(kk[4], (ff_dim,), s_d),
            "l2_w": u(kk[5], (d_model, ff_dim), s_f),        # linear2
            "l2_b": jnp.zeros((d_model,), jnp.float32),
        })

    # Pre-transpose + stack per layer so the kernel does x @ W with no in-kernel `.T`
    # and all layers ride in a single pallas_call.
    def stk(f):
        return jnp.stack([f(p) for p in layers], axis=0)

    return {
        "wqkv": stk(lambda p: p["in_w"].T),            # (L, D, 3D)
        "bqkv": stk(lambda p: p["in_b"][None, :]),     # (L, 1, 3D)
        "wo":   stk(lambda p: p["out_w"].T),           # (L, D, D)
        "bo":   stk(lambda p: p["out_b"][None, :]),    # (L, 1, D)
        "ln1_g": stk(lambda p: p["ln1_g"][None, :]),
        "ln1_b": stk(lambda p: p["ln1_b"][None, :]),
        "ln2_g": stk(lambda p: p["ln2_g"][None, :]),
        "ln2_b": stk(lambda p: p["ln2_b"][None, :]),
        "w1":   stk(lambda p: p["l1_w"].T),            # (L, D, FF)
        "b1":   stk(lambda p: p["l1_b"][None, :]),     # (L, 1, FF)
        "w2":   stk(lambda p: p["l2_w"].T),            # (L, FF, D)
        "b2":   stk(lambda p: p["l2_b"][None, :]),     # (L, 1, D)
    }


def init_params(key, image_size=IMAGE_SIZE, d_model=D_MODEL, ff_dim=FF_DIM,
                n_layer=ENCODER_NUM_LAYER):
    seq_l = image_size // PATCH
    patch_dim = 3 * PATCH * PATCH
    ks = jax.random.split(key, 5 + n_layer)
    s_p = 1.0 / math.sqrt(patch_dim)
    u = lambda k, shape, s: jax.random.uniform(k, shape, jnp.float32, -s, s)
    return {
        "conv_w": u(ks[0], (d_model, 3, PATCH, PATCH), s_p),   # nn.Conv2d weight layout
        "conv_b": u(ks[1], (d_model,), s_p),
        "lin_w": u(ks[2], (d_model, patch_dim), s_p),          # nn.Linear weight layout
        "lin_b": u(ks[3], (d_model,), s_p),
        # Declared in the reference __init__; not used by the provided (truncated) forward.
        "positional": jax.random.normal(ks[4], (seq_l * seq_l + 1, d_model), jnp.float32),
        "encoder": init_encoder_params(list(ks[5:]), d_model, ff_dim),
    }


# ============================ main ============================
if __name__ == "__main__":
    key = jax.random.PRNGKey(0)
    k_x, k_p = jax.random.split(key)

    B = 2
    x = jax.random.normal(k_x, (B, 3, IMAGE_SIZE, IMAGE_SIZE), jnp.float32)
    params = init_params(k_p)
    seq = (IMAGE_SIZE // PATCH) ** 2

    # ImageEmbedder.forward (default mode='conv'), exactly as the provided reference.
    emb = image_embedder_forward(params, x, mode="conv")           # (B, seq, D_MODEL)

    # TransformerEncoder submodule (dependent class), fused across all layers.
    enc_out = transformer_encoder_forward(params["encoder"], emb)  # (B, seq, D_MODEL)

    jax.block_until_ready((emb, enc_out))
    assert emb.shape == (B, seq, D_MODEL)
    assert enc_out.shape == (B, seq, D_MODEL)
    assert bool(jnp.all(jnp.isfinite(emb))) and bool(jnp.all(jnp.isfinite(enc_out)))
    print("KERNEL_OK")
</pallas_src>

<mosaic_0001>
module attributes {stable_mosaic.version = 11 : i64} {
  func.func @patch_embed_kernel(%arg0: memref<32x768xf32, #tpu.memory_space<vmem>>, %arg1: memref<768x32xf32, #tpu.memory_space<vmem>>, %arg2: memref<1x32xf32, #tpu.memory_space<vmem>>, %arg3: memref<32x32xf32, #tpu.memory_space<vmem>>) attributes {dimension_semantics = [], scalar_prefetch = 0 : i64, scratch_operands = 0 : i64, tpu.core_type = #tpu.core_type<tc>} {
    %c0 = arith.constant 0 : index
    %c0_0 = arith.constant 0 : index
    %0 = vector.load %arg0[%c0, %c0_0] : memref<32x768xf32, #tpu.memory_space<vmem>>, vector<32x768xf32>
    %c0_1 = arith.constant 0 : index
    %c0_2 = arith.constant 0 : index
    %1 = vector.load %arg1[%c0_1, %c0_2] : memref<768x32xf32, #tpu.memory_space<vmem>>, vector<768x32xf32>
    %cst = arith.constant dense<0.000000e+00> : vector<32x32xf32>
    %2 = tpu.matmul %0, %1, %cst {dimension_numbers = #tpu.dot_dimension_numbers<[1], [0], [0], [1], [0, 0, 1, 1], [], []>} : vector<32x768xf32>, vector<768x32xf32>, vector<32x32xf32> -> vector<32x32xf32>
    %c0_3 = arith.constant 0 : index
    %c0_4 = arith.constant 0 : index
    %3 = vector.load %arg2[%c0_3, %c0_4] : memref<1x32xf32, #tpu.memory_space<vmem>>, vector<1x32xf32>
    %4 = vector.broadcast %3 : vector<1x32xf32> to vector<32x32xf32>
    %5 = arith.addf %2, %4 : vector<32x32xf32>
    %c0_5 = arith.constant 0 : index
    %c0_6 = arith.constant 0 : index
    %6 = vector.load %arg3[%c0_5, %c0_6] : memref<32x32xf32, #tpu.memory_space<vmem>>, vector<32x32xf32>
    tpu.vector_store %arg3[%c0_5, %c0_6], %5 {strides = array<i32>} : memref<32x32xf32, #tpu.memory_space<vmem>>, vector<32x32xf32>,
    return
  }
}

</mosaic_0001>

<llo_original>
// kernel: tpu_custom_call.1
$region0: #{tpu_custom_call.1}
  #allocation0 [shape = 'u32[]', space=smem, size = 0x4, offset = 0x4, fixed_abs, tag = 'smem constant byte address 0x4 - core index']
  #allocation1 [shape = 'u32[72,128]{1,0:T(1,128)}', space=vmem, size = 0x9000, scoped, tag = 'internal scratch']
  %s0 = inlined_call_operand.vmem [shape: f32[32,768], index: 0, kind: input, shape index: {}]
  %s1 = inlined_call_operand.vmem [shape: f32[768,32], index: 1, kind: input, shape index: {}]
  %s2 = inlined_call_operand.vmem [shape: f32[1,32], index: 2, kind: input, shape index: {}]
  %s3 = inlined_call_operand.hbm [shape: f32[32,32], index: 3, kind: output, shape index: {}]
  %s4 = sld [smem:[#allocation0]]
  $region22: #{tpu_custom_call.1} parent=0
    _
  %s6 = ssub.s32 1, %s4
  %s7 = scalar_select 0, %s6, %s4
  $region1: #{tpu_custom_call.1} parent=0
    #allocation2 [shape = 'u8[16384]{0}', space=vmem, size = 0x4000, scoped, tag = 'output window, operand 0, single buffered']
    #allocation3 [shape = 's32[1]{0}', space=sflag, size = 0x4, scoped, tag = 'scoped memory for tpu_custom_call.1']
    %8 = vsyncpa [#allocation3], 0
    // Predicated region
    $region2: #{tpu_custom_call.1} parent=1 // pred_check
      _
    $region3: #{tpu_custom_call.1} parent=1 // pred_check_branch
      %10 = sbr.rel (0) target = $region5
    $region4: #{tpu_custom_call.1} parent=1 // pred_region
      _
    $region5: #{tpu_custom_call.1} parent=1 // pred_fallthru
      _
    // Predicated region
    $region6: #{tpu_custom_call.1} parent=1 // pred_check
      _
    $region7: #{tpu_custom_call.1} parent=1 // pred_check_branch
      %12 = sbr.rel (0) target = $region9
    $region8: #{tpu_custom_call.1} parent=1 // pred_region
      _
    $region9: #{tpu_custom_call.1} parent=1 // pred_fallthru
      _
    // Predicated region
    $region10: #{tpu_custom_call.1} parent=1 // pred_check
      _
    $region11: #{tpu_custom_call.1} parent=1 // pred_check_branch
      %14 = sbr.rel (0) target = $region13
    $region12: #{tpu_custom_call.1} parent=1 // pred_region
      _
    $region13: #{tpu_custom_call.1} parent=1 // pred_fallthru
      _
    %v15 = vld [vmem:[%s0] sm:$0xff]
    %v16 = vld [vmem:[%s0 + $0x8] sm:$0xff]
    %v17 = vld [vmem:[%s0 + $0x10] sm:$0xff]
    %v18 = vld [vmem:[%s0 + $0x18] sm:$0xff]
    %v19 = vld [vmem:[%s0 + $0x20] sm:$0xff]
    %v20 = vld [vmem:[%s0 + $0x28] sm:$0xff]
    %v21 = vld [vmem:[%s0 + $0x30] sm:$0xff]
    %v22 = vld [vmem:[%s0 + $0x38] sm:$0xff]
    %v23 = vld [vmem:[%s0 + $0x40] sm:$0xff]
    %v24 = vld [vmem:[%s0 + $0x48] sm:$0xff]
    %v25 = vld [vmem:[%s0 + $0x50] sm:$0xff]
    %v26 = vld [vmem:[%s0 + $0x58] sm:$0xff]
    %v27 = vld [vmem:[%s0 + $0x60] sm:$0xff]
    %v28 = vld [vmem:[%s0 + $0x68] sm:$0xff]
    %v29 = vld [vmem:[%s0 + $0x70] sm:$0xff]
    %v30 = vld [vmem:[%s0 + $0x78] sm:$0xff]
    %v31 = vld [vmem:[%s0 + $0x80] sm:$0xff]
    %v32 = vld [vmem:[%s0 + $0x88] sm:$0xff]
    %v33 = vld [vmem:[%s0 + $0x90] sm:$0xff]
    %v34 = vld [vmem:[%s0 + $0x98] sm:$0xff]
    %v35 = vld [vmem:[%s0 + $0xa0] sm:$0xff]
    %v36 = vld [vmem:[%s0 + $0xa8] sm:$0xff]
    %v37 = vld [vmem:[%s0 + $0xb0] sm:$0xff]
    %v38 = vld [vmem:[%s0 + $0xb8] sm:$0xff]
    %v39 = vld [vmem:[%s1] sm:$0xff]
    %v40 = vld [vmem:[%s1 + $0x8] sm:$0xff]
    %v41 = vld [vmem:[%s1 + $0x10] sm:$0xff]
    %v42 = vld [vmem:[%s1 + $0x18] sm:$0xff]
    %v43 = vld [vmem:[%s1 + $0x20] sm:$0xff]
    %v44 = vld [vmem:[%s1 + $0x28] sm:$0xff]
    %v45 = vld [vmem:[%s1 + $0x30] sm:$0xff]
    %v46 = vld [vmem:[%s1 + $0x38] sm:$0xff]
    %v47 = vld [vmem:[%s1 + $0x40] sm:$0xff]
    %v48 = vld [vmem:[%s1 + $0x48] sm:$0xff]
    %v49 = vld [vmem:[%s1 + $0x50] sm:$0xff]
    %v50 = vld [vmem:[%s1 + $0x58] sm:$0xff]
    %v51 = vld [vmem:[%s1 + $0x60] sm:$0xff]
    %v52 = vld [vmem:[%s1 + $0x68] sm:$0xff]
    %v53 = vld [vmem:[%s1 + $0x70] sm:$0xff]
    %v54 = vld [vmem:[%s1 + $0x78] sm:$0xff]
    %v55 = vld [vmem:[%s1 + $0x80] sm:$0xff]
    %v56 = vld [vmem:[%s1 + $0x88] sm:$0xff]
    %v57 = vld [vmem:[%s1 + $0x90] sm:$0xff]
    %v58 = vld [vmem:[%s1 + $0x98] sm:$0xff]
    %v59 = vld [vmem:[%s1 + $0xa0] sm:$0xff]
    %v60 = vld [vmem:[%s1 + $0xa8] sm:$0xff]
    %v61 = vld [vmem:[%s1 + $0xb0] sm:$0xff]
    %v62 = vld [vmem:[%s1 + $0xb8] sm:$0xff]
    %v63 = vld [vmem:[%s1 + $0xc0] sm:$0xff]
    %v64 = vld [vmem:[%s1 + $0xc8] sm:$0xff]
    %v65 = vld [vmem:[%s1 + $0xd0] sm:$0xff]
    %v66 = vld [vmem:[%s1 + $0xd8] sm:$0xff]
    %v67 = vld [vmem:[%s1 + $0xe0] sm:$0xff]
    %v68 = vld [vmem:[%s1 + $0xe8] sm:$0xff]
    %v69 = vld [vmem:[%s1 + $0xf0] sm:$0xff]
    %v70 = vld [vmem:[%s1 + $0xf8] sm:$0xff]
    %v71 = vld [vmem:[%s1 + $0x100] sm:$0xff]
    %v72 = vld [vmem:[%s1 + $0x108] sm:$0xff]
    %v73 = vld [vmem:[%s1 + $0x110] sm:$0xff]
    %v74 = vld [vmem:[%s1 + $0x118] sm:$0xff]
    %v75 = vld [vmem:[%s1 + $0x120] sm:$0xff]
    %v76 = vld [vmem:[%s1 + $0x128] sm:$0xff]
    %v77 = vld [vmem:[%s1 + $0x130] sm:$0xff]
    %v78 = vld [vmem:[%s1 + $0x138] sm:$0xff]
    %v79 = vld [vmem:[%s1 + $0x140] sm:$0xff]
    %v80 = vld [vmem:[%s1 + $0x148] sm:$0xff]
    %v81 = vld [vmem:[%s1 + $0x150] sm:$0xff]
    %v82 = vld [vmem:[%s1 + $0x158] sm:$0xff]
    %v83 = vld [vmem:[%s1 + $0x160] sm:$0xff]
    %v84 = vld [vmem:[%s1 + $0x168] sm:$0xff]
    %v85 = vld [vmem:[%s1 + $0x170] sm:$0xff]
    %v86 = vld [vmem:[%s1 + $0x178] sm:$0xff]
    %v87 = vld [vmem:[%s1 + $0x180] sm:$0xff]
    %v88 = vld [vmem:[%s1 + $0x188] sm:$0xff]
    %v89 = vld [vmem:[%s1 + $0x190] sm:$0xff]
    %v90 = vld [vmem:[%s1 + $0x198] sm:$0xff]
    %v91 = vld [vmem:[%s1 + $0x1a0] sm:$0xff]
    %v92 = vld [vmem:[%s1 + $0x1a8] sm:$0xff]
    %v93 = vld [vmem:[%s1 + $0x1b0] sm:$0xff]
    %v94 = vld [vmem:[%s1 + $0x1b8] sm:$0xff]
    %v95 = vld [vmem:[%s1 + $0x1c0] sm:$0xff]
    %v96 = vld [vmem:[%s1 + $0x1c8] sm:$0xff]
    %v97 = vld [vmem:[%s1 + $0x1d0] sm:$0xff]
    %v98 = vld [vmem:[%s1 + $0x1d8] sm:$0xff]
    %v99 = vld [vmem:[%s1 + $0x1e0] sm:$0xff]
    %v100 = vld [vmem:[%s1 + $0x1e8] sm:$0xff]
    %v101 = vld [vmem:[%s1 + $0x1f0] sm:$0xff]
    %v102 = vld [vmem:[%s1 + $0x1f8] sm:$0xff]
    %v103 = vld [vmem:[%s1 + $0x200] sm:$0xff]
    %v104 = vld [vmem:[%s1 + $0x208] sm:$0xff]
    %v105 = vld [vmem:[%s1 + $0x210] sm:$0xff]
    %v106 = vld [vmem:[%s1 + $0x218] sm:$0xff]
    %v107 = vld [vmem:[%s1 + $0x220] sm:$0xff]
    %v108 = vld [vmem:[%s1 + $0x228] sm:$0xff]
    %v109 = vld [vmem:[%s1 + $0x230] sm:$0xff]
    %v110 = vld [vmem:[%s1 + $0x238] sm:$0xff]
    %v111 = vld [vmem:[%s1 + $0x240] sm:$0xff]
    %v112 = vld [vmem:[%s1 + $0x248] sm:$0xff]
    %v113 = vld [vmem:[%s1 + $0x250] sm:$0xff]
    %v114 = vld [vmem:[%s1 + $0x258] sm:$0xff]
    %v115 = vld [vmem:[%s1 + $0x260] sm:$0xff]
    %v116 = vld [vmem:[%s1 + $0x268] sm:$0xff]
    %v117 = vld [vmem:[%s1 + $0x270] sm:$0xff]
    %v118 = vld [vmem:[%s1 + $0x278] sm:$0xff]
    %v119 = vld [vmem:[%s1 + $0x280] sm:$0xff]
    %v120 = vld [vmem:[%s1 + $0x288] sm:$0xff]
    %v121 = vld [vmem:[%s1 + $0x290] sm:$0xff]
    %v122 = vld [vmem:[%s1 + $0x298] sm:$0xff]
    %v123 = vld [vmem:[%s1 + $0x2a0] sm:$0xff]
    %v124 = vld [vmem:[%s1 + $0x2a8] sm:$0xff]
    %v125 = vld [vmem:[%s1 + $0x2b0] sm:$0xff]
    %v126 = vld [vmem:[%s1 + $0x2b8] sm:$0xff]
    %v127 = vld [vmem:[%s1 + $0x2c0] sm:$0xff]
    %v128 = vld [vmem:[%s1 + $0x2c8] sm:$0xff]
    %v129 = vld [vmem:[%s1 + $0x2d0] sm:$0xff]
    %v130 = vld [vmem:[%s1 + $0x2d8] sm:$0xff]
    %v131 = vld [vmem:[%s1 + $0x2e0] sm:$0xff]
    %v132 = vld [vmem:[%s1 + $0x2e8] sm:$0xff]
    %v133 = vld [vmem:[%s1 + $0x2f0] sm:$0xff]
    %v134 = vld [vmem:[%s1 + $0x2f8] sm:$0xff]
    %v135 = vld [vmem:[%s2] sm:$0x1]
    %v137 = vperm.slane %v135, 0
    %139 = vmatpush.msra.mxu0 %v54
    %140 = vmatpush.msra.mxu0 %v53
    %141 = vmatpush.msra.mxu0 %v52
    %142 = vmatpush.msra.mxu0 %v51
    %143 = vmatpush.msra.mxu0 %v50
    %144 = vmatpush.msra.mxu0 %v49
    %145 = vmatpush.msra.mxu0 %v48
    %146 = vmatpush.msra.mxu0 %v47
    %147 = vmatpush.msra.mxu0 %v46
    %148 = vmatpush.msra.mxu0 %v45
    %149 = vmatpush.msra.mxu0 %v44
    %150 = vmatpush.msra.mxu0 %v43
    %151 = vmatpush.msra.mxu0 %v42
    %152 = vmatpush.msra.mxu0 %v41
    %153 = vmatpush.msra.mxu0 %v40
    %154 = vmatpush.msra.mxu0 %v39
    %155 = vmatmul.f32.gmra.mxu0 %v15
    %v156 = vpop.f32.mrf.mxu0
    %v157 = vadd.f32 %v137, %v156
    %158 = vmatmul.f32.gmra.mxu0 %v21
    %v159 = vpop.f32.mrf.mxu0
    %v160 = vadd.f32 %v137, %v159
    %161 = vmatmul.f32.gmra.mxu0 %v27
    %v162 = vpop.f32.mrf.mxu0
    %v163 = vadd.f32 %v137, %v162
    %164 = vmatmul.f32.gmra.mxu0 %v33
    %v165 = vpop.f32.mrf.mxu0
    %v166 = vadd.f32 %v137, %v165
    %167 = vdwg.mxu0
    %168 = vmatpush.msra.mxu0 %v70
    %169 = vmatpush.msra.mxu0 %v69
    %170 = vmatpush.msra.mxu0 %v68
    %171 = vmatpush.msra.mxu0 %v67
    %172 = vmatpush.msra.mxu0 %v66
    %173 = vmatpush.msra.mxu0 %v65
    %174 = vmatpush.msra.mxu0 %v64
    %175 = vmatpush.msra.mxu0 %v63
    %176 = vmatpush.msra.mxu0 %v62
    %177 = vmatpush.msra.mxu0 %v61
    %178 = vmatpush.msra.mxu0 %v60
    %179 = vmatpush.msra.mxu0 %v59
    %180 = vmatpush.msra.mxu0 %v58
    %181 = vmatpush.msra.mxu0 %v57
    %182 = vmatpush.msra.mxu0 %v56
    %183 = vmatpush.msra.mxu0 %v55
    %184 = vmatmul.f32.gmra.mxu0 %v16
    %v185 = vpop.f32.mrf.mxu0
    %v186 = vadd.f32 %v157, %v185
    %187 = vmatmul.f32.gmra.mxu0 %v22
    %v188 = vpop.f32.mrf.mxu0
    %v189 = vadd.f32 %v160, %v188
    %190 = vmatmul.f32.gmra.mxu0 %v28
    %v191 = vpop.f32.mrf.mxu0
    %v192 = vadd.f32 %v163, %v191
    %193 = vmatmul.f32.gmra.mxu0 %v34
    %v194 = vpop.f32.mrf.mxu0
    %v195 = vadd.f32 %v166, %v194
    %196 = vdwg.mxu0
    %197 = vmatpush.msra.mxu0 %v86
    %198 = vmatpush.msra.mxu0 %v85
    %199 = vmatpush.msra.mxu0 %v84
    %200 = vmatpush.msra.mxu0 %v83
    %201 = vmatpush.msra.mxu0 %v82
    %202 = vmatpush.msra.mxu0 %v81
    %203 = vmatpush.msra.mxu0 %v80
    %204 = vmatpush.msra.mxu0 %v79
    %205 = vmatpush.msra.mxu0 %v78
    %206 = vmatpush.msra.mxu0 %v77
    %207 = vmatpush.msra.mxu0 %v76
    %208 = vmatpush.msra.mxu0 %v75
    %209 = vmatpush.msra.mxu0 %v74
    %210 = vmatpush.msra.mxu0 %v73
    %211 = vmatpush.msra.mxu0 %v72
    %212 = vmatpush.msra.mxu0 %v71
    %213 = vmatmul.f32.gmra.mxu0 %v17
    %v214 = vpop.f32.mrf.mxu0
    %v215 = vadd.f32 %v186, %v214
    %216 = vmatmul.f32.gmra.mxu0 %v23
    %v217 = vpop.f32.mrf.mxu0
    %v218 = vadd.f32 %v189, %v217
    %219 = vmatmul.f32.gmra.mxu0 %v29
    %v220 = vpop.f32.mrf.mxu0
    %v221 = vadd.f32 %v192, %v220
    %222 = vmatmul.f32.gmra.mxu0 %v35
    %v223 = vpop.f32.mrf.mxu0
    %v224 = vadd.f32 %v195, %v223
    %225 = vdwg.mxu0
    %226 = vmatpush.msra.mxu0 %v102
    %227 = vmatpush.msra.mxu0 %v101
    %228 = vmatpush.msra.mxu0 %v100
    %229 = vmatpush.msra.mxu0 %v99
    %230 = vmatpush.msra.mxu0 %v98
    %231 = vmatpush.msra.mxu0 %v97
    %232 = vmatpush.msra.mxu0 %v96
    %233 = vmatpush.msra.mxu0 %v95
    %234 = vmatpush.msra.mxu0 %v94
    %235 = vmatpush.msra.mxu0 %v93
    %236 = vmatpush.msra.mxu0 %v92
    %237 = vmatpush.msra.mxu0 %v91
    %238 = vmatpush.msra.mxu0 %v90
    %239 = vmatpush.msra.mxu0 %v89
    %240 = vmatpush.msra.mxu0 %v88
    %241 = vmatpush.msra.mxu0 %v87
    %242 = vmatmul.f32.gmra.mxu0 %v18
    %v243 = vpop.f32.mrf.mxu0
    %v244 = vadd.f32 %v215, %v243
    %245 = vmatmul.f32.gmra.mxu0 %v24
    %v246 = vpop.f32.mrf.mxu0
    %v247 = vadd.f32 %v218, %v246
    %248 = vmatmul.f32.gmra.mxu0 %v30
    %v249 = vpop.f32.mrf.mxu0
    %v250 = vadd.f32 %v221, %v249
    %251 = vmatmul.f32.gmra.mxu0 %v36
    %v252 = vpop.f32.mrf.mxu0
    %v253 = vadd.f32 %v224, %v252
    %254 = vdwg.mxu0
    %255 = vmatpush.msra.mxu0 %v118
    %256 = vmatpush.msra.mxu0 %v117
    %257 = vmatpush.msra.mxu0 %v116
    %258 = vmatpush.msra.mxu0 %v115
    %259 = vmatpush.msra.mxu0 %v114
    %260 = vmatpush.msra.mxu0 %v113
    %261 = vmatpush.msra.mxu0 %v112
    %262 = vmatpush.msra.mxu0 %v111
    %263 = vmatpush.msra.mxu0 %v110
    %264 = vmatpush.msra.mxu0 %v109
    %265 = vmatpush.msra.mxu0 %v108
    %266 = vmatpush.msra.mxu0 %v107
    %267 = vmatpush.msra.mxu0 %v106
    %268 = vmatpush.msra.mxu0 %v105
    %269 = vmatpush.msra.mxu0 %v104
    %270 = vmatpush.msra.mxu0 %v103
    %271 = vmatmul.f32.gmra.mxu0 %v19
    %v272 = vpop.f32.mrf.mxu0
    %v273 = vadd.f32 %v244, %v272
    %274 = vmatmul.f32.gmra.mxu0 %v25
    %v275 = vpop.f32.mrf.mxu0
    %v276 = vadd.f32 %v247, %v275
    %277 = vmatmul.f32.gmra.mxu0 %v31
    %v278 = vpop.f32.mrf.mxu0
    %v279 = vadd.f32 %v250, %v278
    %280 = vmatmul.f32.gmra.mxu0 %v37
    %v281 = vpop.f32.mrf.mxu0
    %v282 = vadd.f32 %v253, %v281
    %283 = vdwg.mxu0
    %284 = vmatpush.msra.mxu0 %v134
    %285 = vmatpush.msra.mxu0 %v133
    %286 = vmatpush.msra.mxu0 %v132
    %287 = vmatpush.msra.mxu0 %v131
    %288 = vmatpush.msra.mxu0 %v130
    %289 = vmatpush.msra.mxu0 %v129
    %290 = vmatpush.msra.mxu0 %v128
    %291 = vmatpush.msra.mxu0 %v127
    %292 = vmatpush.msra.mxu0 %v126
    %293 = vmatpush.msra.mxu0 %v125
    %294 = vmatpush.msra.mxu0 %v124
    %295 = vmatpush.msra.mxu0 %v123
    %296 = vmatpush.msra.mxu0 %v122
    %297 = vmatpush.msra.mxu0 %v121
    %298 = vmatpush.msra.mxu0 %v120
    %299 = vmatpush.msra.mxu0 %v119
    %300 = vmatmul.f32.gmra.mxu0 %v20
    %v301 = vpop.f32.mrf.mxu0
    %v302 = vadd.f32 %v273, %v301
    %303 = vmatmul.f32.gmra.mxu0 %v26
    %v304 = vpop.f32.mrf.mxu0
    %v305 = vadd.f32 %v276, %v304
    %306 = vmatmul.f32.gmra.mxu0 %v32
    %v307 = vpop.f32.mrf.mxu0
    %v308 = vadd.f32 %v279, %v307
    %309 = vmatmul.f32.gmra.mxu0 %v38
    %v310 = vpop.f32.mrf.mxu0
    %v311 = vadd.f32 %v282, %v310
    %312 = vdwg.mxu0
    %vm313 = vcmask 261120
    %314 = vst.msk [vmem:[#allocation2] sm:$0xff] %vm313, %v302
    %315 = vst.msk [vmem:[#allocation2 + $0x8] sm:$0xff] %vm313, %v305
    %316 = vst.msk [vmem:[#allocation2 + $0x10] sm:$0xff] %vm313, %v308
    %317 = vst.msk [vmem:[#allocation2 + $0x18] sm:$0xff] %vm313, %v311
    // Predicated region
    $region14: #{tpu_custom_call.1} parent=1 // pred_check
      _
    $region15: #{tpu_custom_call.1} parent=1 // pred_check_branch
      %319 = sbr.rel (0) target = $region17
    $region16: #{tpu_custom_call.1} parent=1 // pred_region
      %321 = vsyncadd [#allocation3], 0
      %s322 = sshll.u32 [#allocation2], 4
      %s323 = int_to_ptr.vmem [resolvable:$true] %s322
      %s324 = sshll.u32 %s3, 4
      %s325 = int_to_ptr.hbm [resolvable:$true] %s324
      %330 = dma.vmem_to_hbm [thread:$0]  %s323, 512, %s325, [#allocation3], 128, 128, 8
    $region17: #{tpu_custom_call.1} parent=1 // pred_fallthru
      _
    // Predicated region
    $region18: #{tpu_custom_call.1} parent=1 // pred_check
      _
    $region19: #{tpu_custom_call.1} parent=1 // pred_check_branch
      %332 = sbr.rel (0) target = $region21
    $region20: #{tpu_custom_call.1} parent=1 // pred_region
      %334 = dma.done [#allocation3], 512
    $region21: #{tpu_custom_call.1} parent=1 // pred_fallthru
      _
    %335 = vsyncpa [#allocation3], 1

</llo_original>
